<compile_context>
chip_gen: v7x
topology: tpu7x:2x2x1
jax: 0.10.0
libtpu: 0.0.40
codegen_flags: <defaults>
</compile_context>

<pallas_src>
import functools

import jax
import jax.numpy as jnp
from jax.experimental import pallas as pl
from jax.experimental.pallas import tpu as pltpu

_K = 7          # max-pool window
_P = _K // 2    # = 3, MaxPool2d padding


def _round_up(v: int, m: int) -> int:
    return (v + m - 1) // m * m


def _lower_median_f32(xf: jax.Array) -> jax.Array:
    """Exact lower median of xf.ravel() (== jnp.sort(x)[(n-1)//2], torch.median).

    Binary search on the order-preserving uint32 key space: 32 passes of
    (compare + sum) over the data -- memory-bound, no O(n log n) sort.
    """
    flat = xf.reshape(-1)
    n = flat.size
    k = (n - 1) // 2                       # 0-indexed rank of the lower median

    bits = jax.lax.bitcast_convert_type(flat, jnp.uint32)
    neg = (bits & jnp.uint32(0x80000000)) != 0
    keys = jnp.where(neg, ~bits, bits | jnp.uint32(0x80000000))

    def body(_, lo_hi):
        lo, hi = lo_hi
        mid = lo + (hi - lo) // 2
        cnt = jnp.sum((keys <= mid).astype(jnp.int32))
        go_low = cnt >= (k + 1)
        new_lo = jnp.where(go_low, lo, mid + jnp.uint32(1))
        new_hi = jnp.where(go_low, mid, hi)
        return new_lo, new_hi

    lo0 = jnp.asarray(0, jnp.uint32)
    hi0 = jnp.asarray(0xFFFFFFFF, jnp.uint32)
    lo, _ = jax.lax.fori_loop(0, 32, body, (lo0, hi0))

    med_bits = jnp.where((lo & jnp.uint32(0x80000000)) != 0,
                         lo ^ jnp.uint32(0x80000000), ~lo)
    return jax.lax.bitcast_convert_type(med_bits, jnp.float32)


def _nms_kernel(med_ref, x_ref, o_ref, s_ref, *, H, W):
    """Median-threshold + separable 7x7 NMS for a block of G images.

    med_ref : SMEM (1,)               f32 -- global lower median (scalar prefetch)
    x_ref   : VMEM (G, H, W)          f32 -- unpadded cornerness maps
    o_ref   : VMEM (G, H, W)          f32 -- NMS'd cornerness maps
    s_ref   : VMEM (G, Hpad, Wpad)    f32 -- lane/sublane-aligned -inf canvas
    """
    G, Hpad, Wpad = s_ref.shape
    med = med_ref[0]

    x = x_ref[...]                                    # (G, H, W)
    xt = jnp.where(x > med, x, 0.0)                   # global-median threshold

    # Aligned working canvas: -inf everywhere, thresholded values in each
    # image's top-left (H, W) corner.  The >=3 rows / >=3 lanes of -inf slack
    # make circular rolls exactly equivalent to MaxPool2d's -inf padding and
    # stop any leakage between images stacked along the sublane axis.
    s_ref[...] = jnp.full(s_ref.shape, -jnp.inf, dtype=s_ref.dtype)
    s_ref[:, :H, :W] = xt

    # Collapse (G, Hpad) onto the sublane axis: rolls run on one plain 2-D
    # (sublane, lane) layout.  Hpad % 8 == 0 so the reshape is layout-free.
    s = s_ref[...].reshape(G * Hpad, Wpad)
    GH = G * Hpad

    # Separable 7x7 stride-1 max pool: log-tree of circular rolls (XLU) and
    # maxima (VPU) -- 8 rolls + 6 maxes total, no relayouts, no edge masks.
    t = jnp.maximum(s, pltpu.roll(s, Wpad - 1, axis=1))
    t = jnp.maximum(t, pltpu.roll(t, Wpad - 2, axis=1))
    t = jnp.maximum(t, pltpu.roll(t, Wpad - 3, axis=1))   # width-7 window
    t = pltpu.roll(t, _P, axis=1)                          # center it

    u = jnp.maximum(t, pltpu.roll(t, GH - 1, axis=0))
    u = jnp.maximum(u, pltpu.roll(u, GH - 2, axis=0))
    u = jnp.maximum(u, pltpu.roll(u, GH - 3, axis=0))      # height-7 window
    u = pltpu.roll(u, _P, axis=0)                          # center it

    m = u.reshape(G, Hpad, Wpad)[:, :H, :W]                # 7x7 pooled max
    # where(xt == pool, 1, 0) * xt  folded into a single select.
    o_ref[...] = jnp.where(xt == m, xt, 0.0)


def _vmem_limit_bytes() -> int:
    """Generation-aware VMEM limit: ~48 MiB on v7x (64 MiB), 96 MiB on v5e/v6e."""
    cap = 128 * 1024 * 1024
    try:
        cap = int(pltpu.get_tpu_info().vmem_capacity_bytes)
    except Exception:
        pass
    return min(cap * 3 // 4, 96 * 1024 * 1024)


def _pick_images_per_block(nc, H, W, Hpad, Wpad, budget_bytes):
    """Largest divisor G of nc that fits the VMEM budget, capped so the
    'parallel' grid keeps >= 2 steps (megacore sharding) whenever nc >= 2."""
    per_in = H * W * 4
    per_scr = Hpad * Wpad * 4
    # 2x double-buffered input + 2x output windows + scratch + ~3 live temps.
    per_img = 4 * per_in + 4 * per_scr
    cap = max(1, budget_bytes // per_img)
    g_max = max(1, nc // 2) if nc >= 2 else 1
    g = 1
    for d in range(1, nc + 1):
        if nc % d == 0 and d <= cap and d <= g_max:
            g = d
    return g


def nms_layer(x: jax.Array) -> jax.Array:
    """Pallas TPU implementation of NMSLayer.forward. x: (N, 1, H, W)."""
    N, C, H, W = x.shape
    # TODO(synk): keep bf16 inputs in bf16 end-to-end on v6e/v7x (halves HBM
    # traffic); f32 kept here for exact parity with the reference on all gens.
    xf = x.astype(jnp.float32)

    # Exact torch.median (lower median) without a full sort.
    med = _lower_median_f32(xf).reshape(1)

    nc = N * C
    xr = xf.reshape(nc, H, W)              # no pad copy: borders handled in-kernel

    Hpad = _round_up(H + _P, 8)            # >=3 rows of -inf slack, sublane-aligned
    Wpad = _round_up(W + _P, 128)          # >=3 lanes of -inf slack, lane-aligned

    vmem_limit = _vmem_limit_bytes()
    G = _pick_images_per_block(nc, H, W, Hpad, Wpad, budget_bytes=vmem_limit)

    # TODO(synk): very large single images (e.g. 1080x1920 on v7x's 64 MiB VMEM)
    # should additionally be row-striped with a 3-row halo via a second grid axis.
    # TODO(synk): for W < 128, packing several images along the lane axis would
    # make the output store lane-dense; realistic Harris maps have W >= 128.

    kernel = functools.partial(_nms_kernel, H=H, W=W)
    out = pl.pallas_call(
        kernel,
        out_shape=jax.ShapeDtypeStruct((nc, H, W), jnp.float32),
        grid_spec=pltpu.PrefetchScalarGridSpec(
            num_scalar_prefetch=1,                    # median scalar -> SMEM
            grid=(nc // G,),
            in_specs=[pl.BlockSpec((G, H, W), lambda i, med: (i, 0, 0))],
            out_specs=pl.BlockSpec((G, H, W), lambda i, med: (i, 0, 0)),
            scratch_shapes=[pltpu.VMEM((G, Hpad, Wpad), jnp.float32)],
        ),
        compiler_params=pltpu.CompilerParams(
            dimension_semantics=("parallel",),        # images are independent
            vmem_limit_bytes=vmem_limit,
        ),
    )(med, xr)

    return out.reshape(N, C, H, W).astype(x.dtype)


def _nms_ref(x: jax.Array) -> jax.Array:
    """Pure-JAX reference mirroring the PyTorch forward (for validation)."""
    xf = x.astype(jnp.float32)
    med = jnp.sort(xf.reshape(-1))[(xf.size - 1) // 2]
    xt = jnp.where(xf > med, xf, 0.0)
    b = jax.lax.reduce_window(
        xt, -jnp.inf, jax.lax.max,
        window_dimensions=(1, 1, _K, _K),
        window_strides=(1, 1, 1, 1),
        padding=[(0, 0), (0, 0), (_P, _P), (_P, _P)],
    )
    return jnp.where(xt == b, 1.0, 0.0) * xt


if __name__ == "__main__":
    key = jax.random.PRNGKey(0)
    # (num_image, 1, height, width) single-channel cornerness maps.
    x = jax.random.normal(key, (2, 1, 16, 16), dtype=jnp.float32)

    out = nms_layer(x)
    jax.block_until_ready(out)

    ref = _nms_ref(x)
    assert out.shape == (2, 1, 16, 16)
    assert jnp.allclose(out, ref), "Pallas NMS output mismatch vs reference"

    print("KERNEL_OK")
</pallas_src>

<mosaic_0001>
module attributes {stable_mosaic.version = 11 : i64} {
  func.func @_nms_kernel(%arg0: i32, %arg1: memref<1xf32, #tpu.memory_space<smem>>, %arg2: memref<1x16x16xf32, #tpu.memory_space<vmem>>, %arg3: memref<1x16x16xf32, #tpu.memory_space<vmem>>, %arg4: memref<1x24x128xf32, #tpu.memory_space<vmem>>) attributes {dimension_semantics = [#tpu.dimension_semantics<parallel>], iteration_bounds = array<i64: 2>, scalar_prefetch = 1 : i64, scratch_operands = 1 : i64, tpu.core_type = #tpu.core_type<tc>, window_params = [{transform_indices = @transform_0, window_bounds = array<i64: 1, 16, 16>}, {transform_indices = @transform_1, window_bounds = array<i64: 1, 16, 16>}]} {
    %c0 = arith.constant 0 : index
    %0 = memref.load %arg1[%c0] : memref<1xf32, #tpu.memory_space<smem>>
    %c0_0 = arith.constant 0 : index
    %c0_1 = arith.constant 0 : index
    %c0_2 = arith.constant 0 : index
    %1 = vector.load %arg2[%c0_0, %c0_1, %c0_2] : memref<1x16x16xf32, #tpu.memory_space<vmem>>, vector<1x16x16xf32>
    %2 = vector.broadcast %0 : f32 to vector<1x16x16xf32>
    %3 = arith.cmpf ogt, %1, %2 : vector<1x16x16xf32>
    %cst = arith.constant 0.000000e+00 : f32
    %4 = vector.broadcast %cst : f32 to vector<1x16x16xf32>
    %5 = arith.select %3, %1, %4 : vector<1x16x16xi1>, vector<1x16x16xf32>
    %cst_3 = arith.constant 0xFF800000 : f32
    %6 = vector.broadcast %cst_3 : f32 to vector<1x24x128xf32>
    %c0_4 = arith.constant 0 : index
    %c0_5 = arith.constant 0 : index
    %c0_6 = arith.constant 0 : index
    %7 = vector.load %arg4[%c0_4, %c0_5, %c0_6] : memref<1x24x128xf32, #tpu.memory_space<vmem>>, vector<1x24x128xf32>
    tpu.vector_store %arg4[%c0_4, %c0_5, %c0_6], %6 {strides = array<i32>} : memref<1x24x128xf32, #tpu.memory_space<vmem>>, vector<1x24x128xf32>,
    %c0_7 = arith.constant 0 : index
    %c0_8 = arith.constant 0 : index
    %c0_9 = arith.constant 0 : index
    %8 = vector.load %arg4[%c0_7, %c0_8, %c0_9] : memref<1x24x128xf32, #tpu.memory_space<vmem>>, vector<1x16x16xf32>
    tpu.vector_store %arg4[%c0_7, %c0_8, %c0_9], %5 {strides = array<i32>} : memref<1x24x128xf32, #tpu.memory_space<vmem>>, vector<1x16x16xf32>,
    %c0_10 = arith.constant 0 : index
    %c0_11 = arith.constant 0 : index
    %c0_12 = arith.constant 0 : index
    %9 = vector.load %arg4[%c0_10, %c0_11, %c0_12] : memref<1x24x128xf32, #tpu.memory_space<vmem>>, vector<1x24x128xf32>
    %10 = vector.shape_cast %9 : vector<1x24x128xf32> to vector<24x128xf32>
    %c127_i32 = arith.constant 127 : i32
    %11 = tpu.dynamic_rotate %10 by %c127_i32 dim 1 : vector<24x128xf32>, i32 -> vector<24x128xf32>
    %12 = arith.maximumf %10, %11 : vector<24x128xf32>
    %c126_i32 = arith.constant 126 : i32
    %13 = tpu.dynamic_rotate %12 by %c126_i32 dim 1 : vector<24x128xf32>, i32 -> vector<24x128xf32>
    %14 = arith.maximumf %12, %13 : vector<24x128xf32>
    %c125_i32 = arith.constant 125 : i32
    %15 = tpu.dynamic_rotate %14 by %c125_i32 dim 1 : vector<24x128xf32>, i32 -> vector<24x128xf32>
    %16 = arith.maximumf %14, %15 : vector<24x128xf32>
    %c3_i32 = arith.constant 3 : i32
    %17 = tpu.dynamic_rotate %16 by %c3_i32 dim 1 : vector<24x128xf32>, i32 -> vector<24x128xf32>
    %c23_i32 = arith.constant 23 : i32
    %18 = tpu.dynamic_rotate %17 by %c23_i32 dim 0 : vector<24x128xf32>, i32 -> vector<24x128xf32>
    %19 = arith.maximumf %17, %18 : vector<24x128xf32>
    %c22_i32 = arith.constant 22 : i32
    %20 = tpu.dynamic_rotate %19 by %c22_i32 dim 0 : vector<24x128xf32>, i32 -> vector<24x128xf32>
    %21 = arith.maximumf %19, %20 : vector<24x128xf32>
    %c21_i32 = arith.constant 21 : i32
    %22 = tpu.dynamic_rotate %21 by %c21_i32 dim 0 : vector<24x128xf32>, i32 -> vector<24x128xf32>
    %23 = arith.maximumf %21, %22 : vector<24x128xf32>
    %c3_i32_13 = arith.constant 3 : i32
    %24 = tpu.dynamic_rotate %23 by %c3_i32_13 dim 0 : vector<24x128xf32>, i32 -> vector<24x128xf32>
    %25 = vector.shape_cast %24 : vector<24x128xf32> to vector<1x24x128xf32>
    %26 = vector.extract_strided_slice %25 {offsets = [0, 0, 0], sizes = [1, 16, 16], strides = [1, 1, 1]} : vector<1x24x128xf32> to vector<1x16x16xf32>
    %27 = arith.cmpf oeq, %5, %26 : vector<1x16x16xf32>
    %cst_14 = arith.constant 0.000000e+00 : f32
    %28 = vector.broadcast %cst_14 : f32 to vector<1x16x16xf32>
    %29 = arith.select %27, %5, %28 : vector<1x16x16xi1>, vector<1x16x16xf32>
    %c0_15 = arith.constant 0 : index
    %c0_16 = arith.constant 0 : index
    %c0_17 = arith.constant 0 : index
    %30 = vector.load %arg3[%c0_15, %c0_16, %c0_17] : memref<1x16x16xf32, #tpu.memory_space<vmem>>, vector<1x16x16xf32>
    tpu.vector_store %arg3[%c0_15, %c0_16, %c0_17], %29 {strides = array<i32>} : memref<1x16x16xf32, #tpu.memory_space<vmem>>, vector<1x16x16xf32>,
    return
  }
  func.func @transform_0(%arg0: i32, %arg1: memref<1xf32, #tpu.memory_space<smem>>) -> (i32, i32, i32) {
    %c0_i32 = arith.constant 0 : i32
    %c0_i32_0 = arith.constant 0 : i32
    %c0_i32_1 = arith.constant 0 : i32
    return %arg0, %c0_i32, %c0_i32_0 : i32, i32, i32
  }
  func.func @transform_1(%arg0: i32, %arg1: memref<1xf32, #tpu.memory_space<smem>>) -> (i32, i32, i32) {
    %c0_i32 = arith.constant 0 : i32
    %c0_i32_0 = arith.constant 0 : i32
    %c0_i32_1 = arith.constant 0 : i32
    return %arg0, %c0_i32, %c0_i32_0 : i32, i32, i32
  }
}

</mosaic_0001>

<llo_original>
// kernel: tpu_custom_call.1
$region0: #{tpu_custom_call.1}
  #allocation0 [shape = 'u32[]', space=smem, size = 0x4, offset = 0x4, fixed_abs, tag = 'smem constant byte address 0x4 - core index']
  #allocation1 [shape = 'u32[144,128]{1,0:T(1,128)}', space=vmem, size = 0x12000, scoped, tag = 'internal scratch']
  #allocation2 [shape = 'f32[1,24,128]{2,1,0:T(8,128)}', space=vmem, size = 0x3000, scoped, tag = 'scratch operand']
  #allocation3 [shape = 's32[1]{0}', space=sflag, size = 0x4, scoped, tag = 'scoped memory for tpu_custom_call.1']
  #allocation4 [shape = 'f32[1]{0:T(128)S(6)}', space=smem, size = 0x200, scoped, tag = 'prefetched SMEM operand 0']
  %s0 = inlined_call_operand.<no memory space> [shape: f32[1], index: 0, kind: input, shape index: {}]
  %s1 = inlined_call_operand.hbm [shape: f32[2,16,16], index: 1, kind: input, shape index: {}]
  %s2 = inlined_call_operand.hbm [shape: f32[2,16,16], index: 2, kind: output, shape index: {}]
  %s3 = sld [smem:[#allocation0]]
  $region41: #{tpu_custom_call.1} parent=0
    _
  %s5 = ssub.s32 1, %s3
  %s6 = scalar_select 0, %s5, %s3
  %7 = sst [smem:[#allocation4]] %s0
  $region1: #{tpu_custom_call.1} parent=0
    #allocation5 [shape = 'u8[16384]{0}', space=vmem, size = 0x4000, scoped, tag = 'input window, operand 1']
    #allocation6 [shape = 's32[2]{0}', space=sflag, size = 0x8, scoped, tag = 'scoped memory for tpu_custom_call.1']
    #allocation7 [shape = 's32[2]{0}', space=sflag, size = 0x8, scoped, tag = 'scoped memory for tpu_custom_call.1']
    #allocation8 [shape = 'u8[16384]{0}', space=vmem, size = 0x4000, scoped, tag = 'output window, operand 0']
    %8 = vsyncpa [#allocation6], 0
    %s9 = scalar_lea.sflag [#allocation6], 1
    %10 = vsyncpa %s9, 0
    %11 = vsyncpa [#allocation7], 0
    %s12 = scalar_lea.sflag [#allocation7], 1
    %13 = vsyncpa %s12, 0
    loop: start=0, step=1, limit=4
    $region2: #{tpu_custom_call.1} parent=1 // loop_pre_header
      _
    $region3: #{tpu_custom_call.1} parent=1 // loop_header
      %s15 = sphi 0, %s19
      %p16 = scmp.ge.s32.totalorder %s15, 4
      %s25 = sphi 0, %s27
      %s28 = sphi 0, %s25
      %s29 = sphi 0, %s28
      %s45 = sphi 0, %s29
      %s51 = sphi 0, %s53
      %s54 = sphi 0, %s51
      %s55 = sphi 0, %s54
      %s71 = sphi 0, %s55
    $region4: #{tpu_custom_call.1} parent=1 // loop_header_branch
      %18 = sbr.rel (%p16) target = $region8
    $region5: #{tpu_custom_call.1} parent=1 // loop_body
      %s20 = ssub.s32 %s15, 1
      %s21 = ssub.s32 %s15, 2
      %s22 = sadd.s32 %s15, 1
      %s23 = ssub.s32 %s15, %s22
      %p24 = scmp.eq.s32.totalorder %s23, 0
      %s26 = sadd.s32 %s25, 1
      %s27 = scalar_select %p24, %s25, %s26
      %p30 = pneg %p24
      %p31 = scmp.eq.s32.totalorder %s15, 1
      %p32 = por %p30, %p31
      %p33 = scmp.ne.s32.totalorder %s25, %s28
      %p34 = scmp.eq.s32.totalorder %s15, 0
      %p35 = por %p33, %p34
      %p36 = scmp.ne.s32.totalorder %s25, %s28
      %p37 = scmp.eq.s32.totalorder %s20, 1
      %p38 = por %p36, %p37
      %p39 = scmp.ne.s32.totalorder %s28, %s29
      %p40 = scmp.eq.s32.totalorder %s20, 0
      %p41 = por %p39, %p40
      %p42 = scmp.ne.s32.totalorder %s28, %s29
      %p43 = scmp.eq.s32.totalorder %s21, 1
      %p44 = por %p42, %p43
      %p46 = scmp.ne.s32.totalorder %s29, %s45
      %p47 = scmp.eq.s32.totalorder %s21, 0
      %p48 = por %p46, %p47
      %s49 = ssub.s32 %s15, %s22
      %p50 = scmp.eq.s32.totalorder %s49, 0
      %s52 = sadd.s32 %s51, 1
      %s53 = scalar_select %p50, %s51, %s52
      %p56 = pneg %p50
      %p57 = scmp.eq.s32.totalorder %s15, 1
      %p58 = por %p56, %p57
      %p59 = scmp.ne.s32.totalorder %s51, %s54
      %p60 = scmp.eq.s32.totalorder %s15, 0
      %p61 = por %p59, %p60
      %p62 = scmp.ne.s32.totalorder %s51, %s54
      %p63 = scmp.eq.s32.totalorder %s20, 1
      %p64 = por %p62, %p63
      %p65 = scmp.ne.s32.totalorder %s54, %s55
      %p66 = scmp.eq.s32.totalorder %s20, 0
      %p67 = por %p65, %p66
      %p68 = scmp.ne.s32.totalorder %s54, %s55
      %p69 = scmp.eq.s32.totalorder %s21, 1
      %p70 = por %p68, %p69
      %p72 = scmp.ne.s32.totalorder %s55, %s71
      %p73 = scmp.eq.s32.totalorder %s21, 0
      %p74 = por %p72, %p73
      %p75 = scmp.le.s32.totalorder 1, %s15
      %p76 = scmp.lt.s32.totalorder %s15, 3
      %p77 = pnand %p75, %p76
      %p78 = pneg %p77
      // Predicated region
      $region9: #{tpu_custom_call.1} parent=5 // pred_check
        _
      $region10: #{tpu_custom_call.1} parent=5 // pred_check_branch
        %80 = sbr.rel (%p77) target = $region12
      $region11: #{tpu_custom_call.1} parent=5 // pred_region
        %s81 = ssub.s32 %s15, 1
      $region12: #{tpu_custom_call.1} parent=5 // pred_fallthru
        _
      %p82 = scmp.lt.s32.totalorder %s15, 2
      // Predicated region
      $region13: #{tpu_custom_call.1} parent=5 // pred_check
        %p83 = pneg %p82
      $region14: #{tpu_custom_call.1} parent=5 // pred_check_branch
        %85 = sbr.rel (%p83) target = $region16
      $region15: #{tpu_custom_call.1} parent=5 // pred_region
        // Predicated region
        $region17: #{tpu_custom_call.1} parent=15 // pred_check
          %p86 = pneg %p35
        $region18: #{tpu_custom_call.1} parent=15 // pred_check_branch
          %88 = sbr.rel (%p86) target = $region20
        $region19: #{tpu_custom_call.1} parent=15 // pred_region
          %s89 = sand.u32 %s25, 1
          %s90 = scalar_lea.sflag [#allocation6], %s89
          %s91 = sand.u32 %s25, 1
          %s92 = smul.addr %s91, 16
          %s93 = scalar_lea.vmem [#allocation5], %s92
          %s95 = ssub.s32 256, 256
          %96 = vsyncadd %s90, %s95
          %s97 = smul.addr %s15, 2
          %s98 = smul.addr %s97, 128
          %s99 = scalar_lea.hbm %s1, %s98
          %s100 = sshll.u32 %s93, 4
          %s101 = int_to_ptr.vmem [resolvable:$true] %s100
          %106 = dma.hbm_to_vmem [thread:$0]  %s99, 256, %s101, %s90, 128, 128, 8
        $region20: #{tpu_custom_call.1} parent=15 // pred_fallthru
          _
      $region16: #{tpu_custom_call.1} parent=5 // pred_fallthru
        _
      %p107 = scmp.le.s32.totalorder 1, %s15
      %p108 = scmp.lt.s32.totalorder %s15, 3
      %p109 = pnand %p107, %p108
      %p110 = pneg %p109
      // Predicated region
      $region21: #{tpu_custom_call.1} parent=5 // pred_check
        _
      $region22: #{tpu_custom_call.1} parent=5 // pred_check_branch
        %112 = sbr.rel (%p109) target = $region24
      $region23: #{tpu_custom_call.1} parent=5 // pred_region
        %s113 = ssub.s32 %s15, 1
        %s114 = sand.u32 %s28, 1
        %s115 = scalar_lea.sflag [#allocation6], %s114
        %s116 = sand.u32 %s28, 1
        %s117 = smul.addr %s116, 16
        %s118 = scalar_lea.vmem [#allocation5], %s117
        // Predicated region
        $region25: #{tpu_custom_call.1} parent=23 // pred_check
          %p119 = pneg %p41
        $region26: #{tpu_custom_call.1} parent=23 // pred_check_branch
          %121 = sbr.rel (%p119) target = $region28
        $region27: #{tpu_custom_call.1} parent=23 // pred_region
          %122 = dma.done %s115, 256
        $region28: #{tpu_custom_call.1} parent=23 // pred_fallthru
          _
        %s123 = sand.u32 %s28, 1
        %s124 = scalar_lea.sflag [#allocation6], %s123
        %s125 = sand.u32 %s28, 1
        %s126 = smul.addr %s125, 16
        %s127 = scalar_lea.vmem [#allocation5], %s126
        %p128 = pneg %p41
        %p129 = pneg %p38
        %p130 = pneg %p67
        %p131 = pneg %p64
        %s132 = sand.u32 %s54, 1
        %s133 = scalar_lea.sflag [#allocation7], %s132
        %s134 = sand.u32 %s54, 1
        %s135 = smul.addr %s134, 16
        %s136 = scalar_lea.vmem [#allocation8], %s135
        %s137 = sld [smem:[#allocation4]]
        %v138 = vld [vmem:[%s118] sm:$0xff]
        %v139 = vld [vmem:[%s118 + $0x8] sm:$0xff]
        %v140 = vstv %s137
        %vm141 = vcmp.gt.f32.partialorder %v138, %v140
        %vm142 = vcmp.gt.f32.partialorder %v139, %v140
        %v143 = vsel %vm141, %v138, 0.0
        %v144 = vsel %vm142, %v139, 0.0
        %145 = vst [vmem:[#allocation2] sm:$0xff] -inf
        %146 = vst [vmem:[#allocation2 + $0x8] sm:$0xff] -inf
        %147 = vst [vmem:[#allocation2 + $0x10] sm:$0xff] -inf
        %vm148 = vcmask 130048
        %149 = vst.msk [vmem:[#allocation2] sm:$0xff] %vm148, %v143
        %150 = vst.msk [vmem:[#allocation2 + $0x8] sm:$0xff] %vm148, %v144
        %v151 = vld [vmem:[#allocation2] sm:$0xff]
        %v152 = vld [vmem:[#allocation2 + $0x8] sm:$0xff]
        %v153 = vld [vmem:[#allocation2 + $0x10] sm:$0xff]
        %154 = vrot.lane.b32.xlu0 %v151, 127
        %v155 = vpop.permute.xlu0 %154
        %156 = vrot.lane.b32.xlu0 %v152, 127
        %v157 = vpop.permute.xlu0 %156
        %158 = vrot.lane.b32.xlu0 %v153, 127
        %v159 = vpop.permute.xlu0 %158
        %v160 = vmax.f32 %v151, %v155
        %v161 = vmax.f32 %v152, %v157
        %v162 = vmax.f32 %v153, %v159
        %163 = vrot.lane.b32.xlu0 %v160, 126
        %v164 = vpop.permute.xlu0 %163
        %165 = vrot.lane.b32.xlu0 %v161, 126
        %v166 = vpop.permute.xlu0 %165
        %167 = vrot.lane.b32.xlu0 %v162, 126
        %v168 = vpop.permute.xlu0 %167
        %v169 = vmax.f32 %v160, %v164
        %v170 = vmax.f32 %v161, %v166
        %v171 = vmax.f32 %v162, %v168
        %172 = vrot.lane.b32.xlu0 %v169, 125
        %v173 = vpop.permute.xlu0 %172
        %174 = vrot.lane.b32.xlu0 %v170, 125
        %v175 = vpop.permute.xlu0 %174
        %176 = vrot.lane.b32.xlu0 %v171, 125
        %v177 = vpop.permute.xlu0 %176
        %v178 = vmax.f32 %v169, %v173
        %v179 = vmax.f32 %v170, %v175
        %v180 = vmax.f32 %v171, %v177
        %181 = vrot.lane.b32.xlu0 %v178, 3
        %v182 = vpop.permute.xlu0 %181
        %183 = vrot.lane.b32.xlu0 %v179, 3
        %v184 = vpop.permute.xlu0 %183
        %185 = vrot.lane.b32.xlu0 %v180, 3
        %v186 = vpop.permute.xlu0 %185
        %v187 = vrot.slane %v182, 1
        %v188 = vrot.slane %v184, 1
        %v189 = vrot.slane %v186, 1
        %v190 = vlaneseq
        %v191 = vshrl.u32 %v190, 7
        %vm192 = vcmp.lt.s32.totalorder %v191, 7
        %v193 = vsel %vm192, %v188, %v189
        %v194 = vsel %vm192, %v187, %v188
        %v195 = vsel %vm192, %v189, %v187
        %v196 = vmax.f32 %v182, %v194
        %v197 = vmax.f32 %v184, %v193
        %v198 = vmax.f32 %v186, %v195
        %v199 = vrot.slane %v196, 2
        %v200 = vrot.slane %v197, 2
        %v201 = vrot.slane %v198, 2
        %vm202 = vcmp.lt.s32.totalorder %v191, 6
        %v203 = vsel %vm202, %v200, %v201
        %v204 = vsel %vm202, %v199, %v200
        %v205 = vsel %vm202, %v201, %v199
        %v206 = vmax.f32 %v196, %v204
        %v207 = vmax.f32 %v197, %v203
        %v208 = vmax.f32 %v198, %v205
        %v209 = vrot.slane %v206, 3
        %v210 = vrot.slane %v207, 3
        %v211 = vrot.slane %v208, 3
        %vm212 = vcmp.lt.s32.totalorder %v191, 5
        %v213 = vsel %vm212, %v210, %v211
        %v214 = vsel %vm212, %v209, %v210
        %v215 = vsel %vm212, %v211, %v209
        %v216 = vmax.f32 %v206, %v214
        %v217 = vmax.f32 %v207, %v213
        %v218 = vmax.f32 %v208, %v215
        %v219 = vrot.slane %v216, 5
        %v220 = vrot.slane %v217, 5
        %v221 = vrot.slane %v218, 5
        %vm222 = vcmp.lt.s32.totalorder %v191, 3
        %v223 = vsel %vm222, %v219, %v220
        %v224 = vsel %vm222, %v221, %v219
        %vm225 = vcmp.eq.f32.partialorder %v143, %v224
        %vm226 = vcmp.eq.f32.partialorder %v144, %v223
        %v227 = vsel %vm225, %v143, 0.0
        %v228 = vsel %vm226, %v144, 0.0
        %229 = vst.msk [vmem:[%s136] sm:$0xff] %vm148, %v227
        %230 = vst.msk [vmem:[%s136 + $0x8] sm:$0xff] %vm148, %v228
        %s231 = sand.u32 %s54, 1
        %s232 = scalar_lea.sflag [#allocation7], %s231
        %s233 = sand.u32 %s54, 1
        %s234 = smul.addr %s233, 16
        %s235 = scalar_lea.vmem [#allocation8], %s234
        // Predicated region
        $region29: #{tpu_custom_call.1} parent=23 // pred_check
          %p236 = pneg %p64
        $region30: #{tpu_custom_call.1} parent=23 // pred_check_branch
          %238 = sbr.rel (%p236) target = $region32
        $region31: #{tpu_custom_call.1} parent=23 // pred_region
          %s240 = ssub.s32 256, 256
          %241 = vsyncadd %s232, %s240
          %s242 = smul.addr %s20, 2
          %s243 = smul.addr %s242, 128
          %s244 = scalar_lea.hbm %s2, %s243
          %s245 = sshll.u32 %s235, 4
          %s246 = int_to_ptr.vmem [resolvable:$true] %s245
          %251 = dma.vmem_to_hbm [thread:$0]  %s246, 256, %s244, %s232, 128, 128, 8
        $region32: #{tpu_custom_call.1} parent=23 // pred_fallthru
          _
      $region24: #{tpu_custom_call.1} parent=5 // pred_fallthru
        _
      %p252 = scmp.le.s32.totalorder 2, %s15
      // Predicated region
      $region33: #{tpu_custom_call.1} parent=5 // pred_check
        %p253 = pneg %p252
      $region34: #{tpu_custom_call.1} parent=5 // pred_check_branch
        %255 = sbr.rel (%p253) target = $region36
      $region35: #{tpu_custom_call.1} parent=5 // pred_region
        %s256 = ssub.s32 %s15, 2
        // Predicated region
        $region37: #{tpu_custom_call.1} parent=35 // pred_check
          %p257 = pneg %p70
        $region38: #{tpu_custom_call.1} parent=35 // pred_check_branch
          %259 = sbr.rel (%p257) target = $region40
        $region39: #{tpu_custom_call.1} parent=35 // pred_region
          %s260 = sand.u32 %s55, 1
          %s261 = scalar_lea.sflag [#allocation7], %s260
          %s262 = sand.u32 %s55, 1
          %s263 = smul.addr %s262, 16
          %s264 = scalar_lea.vmem [#allocation8], %s263
          %265 = dma.done %s261, 256
        $region40: #{tpu_custom_call.1} parent=35 // pred_fallthru
          _
      $region36: #{tpu_custom_call.1} parent=5 // pred_fallthru
        _
    $region6: #{tpu_custom_call.1} parent=1 // loop_footer
      %s19 = sadd.s32 1, %s15
    $region7: #{tpu_custom_call.1} parent=1 // loop_footer_branch
      %14 = sbr.rel target = $region3
    $region8: #{tpu_custom_call.1} parent=1 // loop_exit
      _
    %266 = vsyncpa [#allocation6], 1
    %s267 = scalar_lea.sflag [#allocation6], 1
    %268 = vsyncpa %s267, 1
    %269 = vsyncpa [#allocation7], 1
    %s270 = scalar_lea.sflag [#allocation7], 1
    %271 = vsyncpa %s270, 1

</llo_original>
